<compile_context>
chip_gen: v7x
topology: tpu7x:2x2x1
jax: 0.10.0
libtpu: 0.0.40
codegen_flags: <defaults>
</compile_context>

<pallas_src>
import jax
import jax.numpy as jnp
from jax import lax
from jax.experimental import pallas as pl
from jax.experimental.pallas import tpu as pltpu

EPS = 1e-5


# ----------------------------- helpers --------------------------------------

def _cdiv(a, b):
    return -(-a // b)


def _round_up(a, b):
    return _cdiv(a, b) * b


def _vmem_capacity_bytes():
    try:
        return int(pltpu.get_tpu_info().vmem_capacity_bytes)
    except Exception:
        return 64 << 20  # conservative (v7x per-TC VMEM)


def _vmem_limit(block_bytes, cap):
    # in + out blocks, each double-buffered (4 block-sized buffers) + slack for
    # weight/bias and compiler scratch; stay within ~3/4 of physical/per-TC VMEM.
    ceiling = min((cap * 3) // 4, 96 << 20)
    return int(min(ceiling, max(32 << 20, 4 * block_bytes + (4 << 20))))


def _sublane_multiple(itemsize):
    # f32 -> 8, bf16 -> 16, int8/fp8 -> 32
    return max(1, 32 // itemsize)


def _use_native_layout(W):
    # Native NCHW blocks put W on lanes. Below ~50% lane utilization the kernel
    # flips from HBM-bound to VALU/store-bound (masked vst.msk), so repacking to
    # a lane-dense slab is worth the extra transpose pass over HBM.
    return (W % 128 == 0) or (W / _round_up(W, 128) >= 0.5)


def _choose_tiles_rows(P, H, W, itemsize, target_bytes):
    """Tiles for the native (P, H, W) layout (reduction along H = sublanes)."""
    Hp = _round_up(H, _sublane_multiple(itemsize))      # padded sublane extent
    per_lane128 = Hp * 128 * itemsize
    n128 = max(1, int(target_bytes // per_lane128))
    tile_w = min(W, n128 * 128)                         # multiple of 128, or full W
    row_bytes = Hp * _round_up(tile_w, 128) * itemsize  # padded bytes of one plane-row
    tile_p = max(1, min(P, int(target_bytes // row_bytes)))
    # Give the parallel grid at least 2 steps (dual-TC chips) when splittable.
    if _cdiv(P, tile_p) * _cdiv(W, tile_w) < 2:
        if P >= 2:
            tile_p = _cdiv(P, 2)
        elif W >= 256:
            tile_w = _round_up(_cdiv(W, 2), 128)
    block_bytes = tile_p * Hp * _round_up(tile_w, 128) * itemsize
    return tile_p, tile_w, block_bytes


def _choose_tile_cols(H, N, itemsize, target_bytes):
    """Lane tile for the repacked (H, N) layout (reduction along H = sublanes)."""
    Hp = _round_up(H, _sublane_multiple(itemsize))
    per_lane128 = Hp * 128 * itemsize
    n128 = max(1, int(target_bytes // per_lane128))
    if N <= 128:
        tile_n = N                                      # full extent (always legal)
    else:
        # multiple of 128, capped both by the byte target and by ">= 2 grid steps"
        tile_n = max(128, min(n128 * 128, _round_up(_cdiv(N, 2), 128)))
    block_bytes = Hp * _round_up(tile_n, 128) * itemsize
    return tile_n, block_bytes


# ----------------------------- kernels ---------------------------------------

def _ln_rows_kernel(x_ref, w_ref, b_ref, o_ref):
    # Native layout: x_ref (tile_p, H, tile_w); w_ref/b_ref (1, H, 1).
    # Normalize along axis 1 (H, the sublane axis of each block).
    x = x_ref[...].astype(jnp.float32)
    mean = jnp.mean(x, axis=1, keepdims=True)
    msq = jnp.mean(x * x, axis=1, keepdims=True)        # one pass over x
    var = jnp.maximum(msq - mean * mean, 0.0)           # biased variance (torch)
    inv = lax.rsqrt(var + EPS)                          # EUP slot
    w = w_ref[...].astype(jnp.float32)
    b = b_ref[...].astype(jnp.float32)
    o_ref[...] = ((x - mean) * inv * w + b).astype(o_ref.dtype)


def _ln_cols_kernel(x_ref, w_ref, b_ref, o_ref):
    # Repacked lane-dense layout: x_ref (H, tile_n); w_ref/b_ref (H, 1).
    # Normalize along axis 0 (H on sublanes, dense lanes).
    x = x_ref[...].astype(jnp.float32)
    mean = jnp.mean(x, axis=0, keepdims=True)
    msq = jnp.mean(x * x, axis=0, keepdims=True)
    var = jnp.maximum(msq - mean * mean, 0.0)
    inv = lax.rsqrt(var + EPS)
    w = w_ref[...].astype(jnp.float32)
    b = b_ref[...].astype(jnp.float32)
    o_ref[...] = ((x - mean) * inv * w + b).astype(o_ref.dtype)


# ----------------------------- pallas wrappers --------------------------------

def _layernorm_rows(x3, weight, bias, tile_p, tile_w, vmem_limit_bytes):
    P, H, W = x3.shape
    grid = (pl.cdiv(P, tile_p), pl.cdiv(W, tile_w))
    return pl.pallas_call(
        _ln_rows_kernel,
        out_shape=jax.ShapeDtypeStruct((P, H, W), x3.dtype),
        grid=grid,
        in_specs=[
            pl.BlockSpec((tile_p, H, tile_w), lambda i, j: (i, 0, j)),
            # Constant index_map: weight/bias are DMA'd once and reused.
            pl.BlockSpec((1, H, 1), lambda i, j: (0, 0, 0)),
            pl.BlockSpec((1, H, 1), lambda i, j: (0, 0, 0)),
        ],
        out_specs=pl.BlockSpec((tile_p, H, tile_w), lambda i, j: (i, 0, j)),
        compiler_params=pltpu.CompilerParams(
            dimension_semantics=("parallel", "parallel"),
            vmem_limit_bytes=vmem_limit_bytes,
        ),
    )(x3, weight.reshape(1, H, 1), bias.reshape(1, H, 1))


def _layernorm_cols(x2, weight, bias, tile_n, vmem_limit_bytes):
    H, N = x2.shape
    grid = (pl.cdiv(N, tile_n),)
    return pl.pallas_call(
        _ln_cols_kernel,
        out_shape=jax.ShapeDtypeStruct((H, N), x2.dtype),
        grid=grid,
        in_specs=[
            pl.BlockSpec((H, tile_n), lambda j: (0, j)),
            pl.BlockSpec((H, 1), lambda j: (0, 0)),
            pl.BlockSpec((H, 1), lambda j: (0, 0)),
        ],
        out_specs=pl.BlockSpec((H, tile_n), lambda j: (0, j)),
        compiler_params=pltpu.CompilerParams(
            dimension_semantics=("parallel",),
            vmem_limit_bytes=vmem_limit_bytes,
        ),
    )(x2, weight.reshape(H, 1), bias.reshape(H, 1))


# ----------------------------- public entry -----------------------------------

def layer_norm_module(x, weight, bias):
    """Forward pass of the PyTorch LayerNorm module.

    x: (B, C, n_features, W)  -- normalization along dim 2.
    weight, bias: (n_features,)
    """
    B, C, H, W = x.shape
    itemsize = jnp.dtype(x.dtype).itemsize
    cap = _vmem_capacity_bytes()
    target_block_bytes = (12 << 20) if cap >= (96 << 20) else (8 << 20)

    if _use_native_layout(W):
        # NCHW-native: (B*C, H, W) blocks with W on lanes, H-reduction on sublanes.
        x3 = x.reshape(B * C, H, W)                       # free reshape
        tile_p, tile_w, blk = _choose_tiles_rows(B * C, H, W, itemsize, target_block_bytes)
        out3 = _layernorm_rows(x3, weight, bias, tile_p, tile_w, _vmem_limit(blk, cap))
        return out3.reshape(B, C, H, W)

    # Lane-sparse W: repack to a lane-dense (H, B*C*W) slab so lanes are dense
    # (layout plumbing in the wrapper; kernel output is unmasked lane-dense stores).
    N = B * C * W
    x2 = jnp.transpose(x, (2, 0, 1, 3)).reshape(H, N)
    tile_n, blk = _choose_tile_cols(H, N, itemsize, target_block_bytes)
    out2 = _layernorm_cols(x2, weight, bias, tile_n, _vmem_limit(blk, cap))
    return jnp.transpose(out2.reshape(H, B, C, W), (1, 2, 0, 3))


# ----------------------------- reference & test --------------------------------

def _reference(x, weight, bias):
    # Pure-JAX reference of the PyTorch forward.
    xt = jnp.transpose(x, (0, 1, 3, 2)).astype(jnp.float32)
    mean = jnp.mean(xt, axis=-1, keepdims=True)
    var = jnp.mean((xt - mean) ** 2, axis=-1, keepdims=True)
    y = (xt - mean) / jnp.sqrt(var + EPS)
    y = y * weight.astype(jnp.float32) + bias.astype(jnp.float32)
    return jnp.transpose(y, (0, 1, 3, 2)).astype(x.dtype)


if __name__ == "__main__":
    key = jax.random.PRNGKey(0)
    kx, kw, kb, kx2 = jax.random.split(key, 4)

    B, C, n_features, W = 2, 4, 16, 16
    weight = 1.0 + 0.1 * jax.random.normal(kw, (n_features,), dtype=jnp.float32)
    bias = 0.1 * jax.random.normal(kb, (n_features,), dtype=jnp.float32)

    # Lane-sparse path (W=16 -> repacked lane-dense layout).
    x = jax.random.normal(kx, (B, C, n_features, W), dtype=jnp.float32)
    out = jax.block_until_ready(layer_norm_module(x, weight, bias))
    ref = _reference(x, weight, bias)
    assert out.shape == x.shape
    assert float(jnp.max(jnp.abs(out - ref))) < 1e-4

    # Lane-dense path (W=128 -> native NCHW blocks).
    x2 = jax.random.normal(kx2, (B, C, n_features, 128), dtype=jnp.float32)
    out2 = jax.block_until_ready(layer_norm_module(x2, weight, bias))
    ref2 = _reference(x2, weight, bias)
    assert out2.shape == x2.shape
    assert float(jnp.max(jnp.abs(out2 - ref2))) < 1e-4

    print("KERNEL_OK")
</pallas_src>

<mosaic_0001>
module attributes {stable_mosaic.version = 11 : i64} {
  func.func @_ln_cols_kernel(%arg0: i32, %arg1: memref<16x128xf32, #tpu.memory_space<vmem>>, %arg2: memref<16x1xf32, #tpu.memory_space<vmem>>, %arg3: memref<16x1xf32, #tpu.memory_space<vmem>>, %arg4: memref<16x128xf32, #tpu.memory_space<vmem>>) attributes {dimension_semantics = [#tpu.dimension_semantics<parallel>], iteration_bounds = array<i64: 1>, scalar_prefetch = 0 : i64, scratch_operands = 0 : i64, tpu.core_type = #tpu.core_type<tc>, window_params = [{transform_indices = @transform_0, window_bounds = array<i64: 16, 128>}, {pipeline_mode = #tpu.pipeline_mode<synchronous>, transform_indices = @transform_1, window_bounds = array<i64: 16, 1>}, {pipeline_mode = #tpu.pipeline_mode<synchronous>, transform_indices = @transform_2, window_bounds = array<i64: 16, 1>}, {transform_indices = @transform_3, window_bounds = array<i64: 16, 128>}]} {
    %c0 = arith.constant 0 : index
    %c0_0 = arith.constant 0 : index
    %0 = vector.load %arg1[%c0, %c0_0] : memref<16x128xf32, #tpu.memory_space<vmem>>, vector<16x128xf32>
    %cst = arith.constant dense<0.000000e+00> : vector<128xf32>
    %1 = vector.multi_reduction <add>, %0, %cst [0] : vector<16x128xf32> to vector<128xf32>
    %2 = vector.shape_cast %1 : vector<128xf32> to vector<1x128xf32>
    %cst_1 = arith.constant 1.600000e+01 : f32
    %3 = vector.broadcast %cst_1 : f32 to vector<1x128xf32>
    %4 = arith.divf %2, %3 : vector<1x128xf32>
    %5 = arith.mulf %0, %0 : vector<16x128xf32>
    %cst_2 = arith.constant dense<0.000000e+00> : vector<128xf32>
    %6 = vector.multi_reduction <add>, %5, %cst_2 [0] : vector<16x128xf32> to vector<128xf32>
    %7 = vector.shape_cast %6 : vector<128xf32> to vector<1x128xf32>
    %cst_3 = arith.constant 1.600000e+01 : f32
    %8 = vector.broadcast %cst_3 : f32 to vector<1x128xf32>
    %9 = arith.divf %7, %8 : vector<1x128xf32>
    %10 = arith.mulf %4, %4 : vector<1x128xf32>
    %11 = arith.subf %9, %10 : vector<1x128xf32>
    %cst_4 = arith.constant 0.000000e+00 : f32
    %12 = vector.broadcast %cst_4 : f32 to vector<1x128xf32>
    %13 = arith.maximumf %11, %12 : vector<1x128xf32>
    %cst_5 = arith.constant 9.99999974E-6 : f32
    %14 = vector.broadcast %cst_5 : f32 to vector<1x128xf32>
    %15 = arith.addf %13, %14 : vector<1x128xf32>
    %16 = math.rsqrt %15 : vector<1x128xf32>
    %c0_6 = arith.constant 0 : index
    %c0_7 = arith.constant 0 : index
    %17 = vector.load %arg2[%c0_6, %c0_7] : memref<16x1xf32, #tpu.memory_space<vmem>>, vector<16x1xf32>
    %c0_8 = arith.constant 0 : index
    %c0_9 = arith.constant 0 : index
    %18 = vector.load %arg3[%c0_8, %c0_9] : memref<16x1xf32, #tpu.memory_space<vmem>>, vector<16x1xf32>
    %19 = vector.broadcast %4 : vector<1x128xf32> to vector<16x128xf32>
    %20 = arith.subf %0, %19 : vector<16x128xf32>
    %21 = vector.broadcast %16 : vector<1x128xf32> to vector<16x128xf32>
    %22 = arith.mulf %20, %21 : vector<16x128xf32>
    %23 = vector.broadcast %17 : vector<16x1xf32> to vector<16x128xf32>
    %24 = arith.mulf %22, %23 : vector<16x128xf32>
    %25 = vector.broadcast %18 : vector<16x1xf32> to vector<16x128xf32>
    %26 = arith.addf %24, %25 : vector<16x128xf32>
    %c0_10 = arith.constant 0 : index
    %c0_11 = arith.constant 0 : index
    %27 = vector.load %arg4[%c0_10, %c0_11] : memref<16x128xf32, #tpu.memory_space<vmem>>, vector<16x128xf32>
    tpu.vector_store %arg4[%c0_10, %c0_11], %26 {strides = array<i32>} : memref<16x128xf32, #tpu.memory_space<vmem>>, vector<16x128xf32>,
    return
  }
  func.func @transform_0(%arg0: i32) -> (i32, i32) {
    %c0_i32 = arith.constant 0 : i32
    %c0_i32_0 = arith.constant 0 : i32
    return %c0_i32, %arg0 : i32, i32
  }
  func.func @transform_1(%arg0: i32) -> (i32, i32) {
    %c0_i32 = arith.constant 0 : i32
    %c0_i32_0 = arith.constant 0 : i32
    %c0_i32_1 = arith.constant 0 : i32
    return %c0_i32, %c0_i32_0 : i32, i32
  }
  func.func @transform_2(%arg0: i32) -> (i32, i32) {
    %c0_i32 = arith.constant 0 : i32
    %c0_i32_0 = arith.constant 0 : i32
    %c0_i32_1 = arith.constant 0 : i32
    return %c0_i32, %c0_i32_0 : i32, i32
  }
  func.func @transform_3(%arg0: i32) -> (i32, i32) {
    %c0_i32 = arith.constant 0 : i32
    %c0_i32_0 = arith.constant 0 : i32
    return %c0_i32, %arg0 : i32, i32
  }
}

</mosaic_0001>

<llo_original>
// kernel: tpu_custom_call.1
$region0: #{tpu_custom_call.1}
  #allocation0 [shape = 'u32[]', space=smem, size = 0x4, offset = 0x4, fixed_abs, tag = 'smem constant byte address 0x4 - core index']
  #allocation1 [shape = 'u32[144,128]{1,0:T(1,128)}', space=vmem, size = 0x12000, scoped, tag = 'internal scratch']
  %s0 = inlined_call_operand.vmem [shape: f32[16,128], index: 0, kind: input, shape index: {}]
  %s1 = inlined_call_operand.vmem [shape: f32[16,1], index: 1, kind: input, shape index: {}]
  %s2 = inlined_call_operand.vmem [shape: f32[16,1], index: 2, kind: input, shape index: {}]
  %s3 = inlined_call_operand.hbm [shape: f32[16,128], index: 3, kind: output, shape index: {}]
  %s4 = sld [smem:[#allocation0]]
  $region22: #{tpu_custom_call.1} parent=0
    _
  %s6 = ssub.s32 1, %s4
  %s7 = scalar_select 0, %s6, %s4
  $region1: #{tpu_custom_call.1} parent=0
    #allocation2 [shape = 'u8[8192]{0}', space=vmem, size = 0x2000, scoped, tag = 'output window, operand 0, single buffered']
    #allocation3 [shape = 's32[1]{0}', space=sflag, size = 0x4, scoped, tag = 'scoped memory for tpu_custom_call.1']
    %8 = vsyncpa [#allocation3], 0
    // Predicated region
    $region2: #{tpu_custom_call.1} parent=1 // pred_check
      _
    $region3: #{tpu_custom_call.1} parent=1 // pred_check_branch
      %10 = sbr.rel (0) target = $region5
    $region4: #{tpu_custom_call.1} parent=1 // pred_region
      _
    $region5: #{tpu_custom_call.1} parent=1 // pred_fallthru
      _
    // Predicated region
    $region6: #{tpu_custom_call.1} parent=1 // pred_check
      _
    $region7: #{tpu_custom_call.1} parent=1 // pred_check_branch
      %12 = sbr.rel (0) target = $region9
    $region8: #{tpu_custom_call.1} parent=1 // pred_region
      _
    $region9: #{tpu_custom_call.1} parent=1 // pred_fallthru
      _
    // Predicated region
    $region10: #{tpu_custom_call.1} parent=1 // pred_check
      _
    $region11: #{tpu_custom_call.1} parent=1 // pred_check_branch
      %14 = sbr.rel (0) target = $region13
    $region12: #{tpu_custom_call.1} parent=1 // pred_region
      _
    $region13: #{tpu_custom_call.1} parent=1 // pred_fallthru
      _
    %v15 = vld [vmem:[%s0] sm:$0xff]
    %v16 = vld [vmem:[%s0 + $0x8] sm:$0xff]
    %v17 = vadd.f32 %v15, %v16
    %v18 = vrot.slane %v17, 4
    %v19 = vadd.f32 %v17, %v18
    %v20 = vrot.slane %v19, 2
    %v21 = vadd.f32 %v19, %v20
    %v22 = vrot.slane %v21, 1
    %v23 = vadd.f32 %v21, %v22
    %v24 = vrcp.pop 16.0
    %v25 = vmul.f32 %v23, %v24
    %v26 = vmul.f32 %v15, %v15
    %v27 = vmul.f32 %v16, %v16
    %v28 = vadd.f32 %v26, %v27
    %v29 = vrot.slane %v28, 4
    %v30 = vadd.f32 %v28, %v29
    %v31 = vrot.slane %v30, 2
    %v32 = vadd.f32 %v30, %v31
    %v33 = vrot.slane %v32, 1
    %v34 = vadd.f32 %v32, %v33
    %v35 = vmul.f32 %v34, %v24
    %v36 = vmul.f32 %v25, %v25
    %v37 = vsub.f32 %v35, %v36
    %v38 = vmax.f32 %v37, 0.0
    %v39 = vadd.f32 %v38, 1e-05
    %v40 = vrsqrt.pop %v39
    %v41 = vld [vmem:[%s1] sm:$0xff]
    %v42 = vld [vmem:[%s1 + $0x8] sm:$0xff]
    %v43 = vld [vmem:[%s2] sm:$0xff]
    %v44 = vld [vmem:[%s2 + $0x8] sm:$0xff]
    %v45 = vsub.f32 %v15, %v25
    %v46 = vsub.f32 %v16, %v25
    %v47 = vmul.f32 %v45, %v40
    %v48 = vmul.f32 %v46, %v40
    %50 = vset.pattern.permute.xlu0 0
    %51 = vperm.xlu0 %50, %v41
    %v52 = vpop.permute.xlu0 %51
    %55 = vset.pattern.permute.xlu0 0
    %56 = vperm.xlu0 %55, %v42
    %v57 = vpop.permute.xlu0 %56
    %v59 = vmul.f32 %v47, %v52
    %v60 = vmul.f32 %v48, %v57
    %62 = vset.pattern.permute.xlu0 0
    %63 = vperm.xlu0 %62, %v43
    %v64 = vpop.permute.xlu0 %63
    %67 = vset.pattern.permute.xlu0 0
    %68 = vperm.xlu0 %67, %v44
    %v69 = vpop.permute.xlu0 %68
    %v71 = vadd.f32 %v59, %v64
    %v72 = vadd.f32 %v60, %v69
    %73 = vst [vmem:[#allocation2] sm:$0xff] %v71
    %74 = vst [vmem:[#allocation2 + $0x8] sm:$0xff] %v72
    // Predicated region
    $region14: #{tpu_custom_call.1} parent=1 // pred_check
      _
    $region15: #{tpu_custom_call.1} parent=1 // pred_check_branch
      %76 = sbr.rel (0) target = $region17
    $region16: #{tpu_custom_call.1} parent=1 // pred_region
      %s78 = ssub.s32 256, 256
      %79 = vsyncadd [#allocation3], %s78
      %s80 = sshll.u32 [#allocation2], 4
      %s81 = int_to_ptr.vmem [resolvable:$true] %s80
      %86 = dma.vmem_to_hbm [thread:$0]  %s81, 256, %s3, [#allocation3], 128, 128, 8
    $region17: #{tpu_custom_call.1} parent=1 // pred_fallthru
      _
    // Predicated region
    $region18: #{tpu_custom_call.1} parent=1 // pred_check
      _
    $region19: #{tpu_custom_call.1} parent=1 // pred_check_branch
      %88 = sbr.rel (0) target = $region21
    $region20: #{tpu_custom_call.1} parent=1 // pred_region
      %89 = dma.done [#allocation3], 256
    $region21: #{tpu_custom_call.1} parent=1 // pred_fallthru
      _
    %90 = vsyncpa [#allocation3], 1

</llo_original>
